<compile_context>
chip_gen: v6e
topology: v6e:2x2x1
jax: 0.10.0
libtpu: 0.0.40
codegen_flags: <defaults>
</compile_context>

<pallas_src>
import functools

import jax
import jax.numpy as jnp
from jax.experimental import pallas as pl
from jax.experimental.pallas import tpu as pltpu


def _round_up(x, m):
    return (x + m - 1) // m * m


def _conv_ps_kernel(e_ref, a_ref, bias_ref, o_ref, *, whp, l_out_pad):
    """One image per grid step.

    e_ref:    (4*C,  L_in_pad)      space-to-depth'd padded input, flattened spatial
    a_ref:    (4, 4*Cout, 4*C)      per-shift channel-mixing matrices (from conv weight)
    bias_ref: (4*Cout, 1)           conv bias replicated over the 4 unshuffle positions
    o_ref:    (4*Cout, L_out_pad)   pixel-unshuffled output, flattened (dilated) spatial
    """
    e = e_ref[...].astype(jnp.float32)          # load once; the 4 shifted views overlap
    acc = jnp.zeros(o_ref.shape, jnp.float32)
    for qh in range(2):
        for qw in range(2):
            s = qh * 2 + qw
            d = qh * whp + qw                   # static flat-spatial shift
            acc = acc + jnp.dot(
                a_ref[s], e[:, d:d + l_out_pad],
                preferred_element_type=jnp.float32)
    o_ref[...] = (acc + bias_ref[...]).astype(o_ref.dtype)


def downsample_forward(x, weight, bias):
    """Conv2d(C -> C//2, 3x3, padding=1) followed by PixelUnshuffle(2). NCHW in/out."""
    b, c, h, w = x.shape
    c_out = weight.shape[0]
    assert weight.shape == (c_out, c, 3, 3)
    assert h % 2 == 0 and w % 2 == 0

    hh, wh = h // 2, w // 2
    hhp, whp = hh + 1, wh + 1                 # space-to-depth size of the padded image
    n_in = 4 * c
    n_out = 4 * c_out                         # PixelUnshuffle output channels (= 2*dim)

    l_out = hh * whp                          # dilated output length (1 junk col / row)
    l_out_pad = _round_up(l_out, 128)         # lane-dense output stores
    l_in = hhp * whp
    l_in_pad = _round_up(max(l_in, whp + 1 + l_out_pad), 128)

    # conv padding=1, then space-to-depth (factor 2) of the padded image.
    xp = jnp.pad(x, ((0, 0), (0, 0), (1, 1), (1, 1)))            # (B, C, H+2, W+2)
    e = xp.reshape(b, c, hhp, 2, whp, 2)
    e = jnp.transpose(e, (0, 3, 5, 1, 2, 4)).reshape(b, n_in, l_in)
    e = jnp.pad(e, ((0, 0), (0, 0), (0, l_in_pad - l_in)))

    # Channel-mixing matrices:
    #   A[qh*2+qw][co*4 + i*2 + j, (rh*2+rw)*C + ci] = W[co, ci, kh, kw]
    # with kh = 2*qh + rh - i, kw = 2*qw + rw - j (zero when outside the 3x3 window).
    a = jnp.zeros((4, n_out, n_in), jnp.float32)
    for i in range(2):
        for j in range(2):
            for kh in range(3):
                for kw in range(3):
                    qh, rh = (i + kh) // 2, (i + kh) % 2
                    qw, rw = (j + kw) // 2, (j + kw) % 2
                    a = a.at[qh * 2 + qw,
                             (i * 2 + j)::4,
                             (rh * 2 + rw) * c:(rh * 2 + rw) * c + c].set(
                        weight[:, :, kh, kw].astype(jnp.float32))
    bias_ps = jnp.repeat(bias.astype(jnp.float32), 4).reshape(n_out, 1)

    kernel = functools.partial(_conv_ps_kernel, whp=whp, l_out_pad=l_out_pad)
    # TODO(synk): for very large H*W, additionally tile the flattened spatial dim with
    # a halo (pl.Element offsets) instead of one whole-image block per batch.
    out_flat = pl.pallas_call(
        kernel,
        out_shape=jax.ShapeDtypeStruct((b, n_out, l_out_pad), x.dtype),
        grid_spec=pltpu.PrefetchScalarGridSpec(
            num_scalar_prefetch=0,
            grid=(b,),
            in_specs=[
                pl.BlockSpec((None, n_in, l_in_pad), lambda bb: (bb, 0, 0)),
                pl.BlockSpec((4, n_out, n_in), lambda bb: (0, 0, 0)),
                pl.BlockSpec((n_out, 1), lambda bb: (0, 0)),
            ],
            out_specs=pl.BlockSpec((None, n_out, l_out_pad), lambda bb: (bb, 0, 0)),
        ),
        compiler_params=pltpu.CompilerParams(
            dimension_semantics=("parallel",)),
    )(e, a, bias_ps)

    # Drop lane padding + the dilated junk column.  Channel order already matches
    # PixelUnshuffle, so no transpose is needed on the output side.
    out = out_flat[:, :, :l_out].reshape(b, n_out, hh, whp)[:, :, :, :wh]
    return out


if __name__ == "__main__":
    key = jax.random.PRNGKey(0)
    kx, kw_, kb = jax.random.split(key, 3)

    B, DIM, H, W = 2, 4, 16, 16
    x = jax.random.normal(kx, (B, DIM, H, W), dtype=jnp.float32)
    # nn.Conv2d(dim, dim//2, 3, padding=1) parameters: OIHW weight + bias (synthetic init).
    weight = 0.2 * jax.random.normal(kw_, (DIM // 2, DIM, 3, 3), dtype=jnp.float32)
    bias = 0.1 * jax.random.normal(kb, (DIM // 2,), dtype=jnp.float32)

    fwd = jax.jit(downsample_forward)
    out = jax.block_until_ready(fwd(x, weight, bias))

    # Plain-JAX reference with the same semantics as the PyTorch module.
    conv = jax.lax.conv_general_dilated(
        x, weight, window_strides=(1, 1), padding=((1, 1), (1, 1)),
        dimension_numbers=("NCHW", "OIHW", "NCHW"),
        precision=jax.lax.Precision.HIGHEST) + bias[None, :, None, None]
    co = DIM // 2
    ref = conv.reshape(B, co, H // 2, 2, W // 2, 2)
    ref = jnp.transpose(ref, (0, 1, 3, 5, 2, 4)).reshape(B, co * 4, H // 2, W // 2)

    assert out.shape == (B, DIM * 2, H // 2, W // 2)
    max_err = float(jnp.max(jnp.abs(out - ref)))
    assert max_err < 1e-4, max_err
    print("KERNEL_OK")
</pallas_src>

<mosaic_0001>
module attributes {stable_mosaic.version = 11 : i64} {
  func.func @_conv_ps_kernel(%arg0: i32, %arg1: memref<1x16x256xf32, #tpu.memory_space<vmem>>, %arg2: memref<4x8x16xf32, #tpu.memory_space<vmem>>, %arg3: memref<8x1xf32, #tpu.memory_space<vmem>>, %arg4: memref<1x8x128xf32, #tpu.memory_space<vmem>>) attributes {dimension_semantics = [#tpu.dimension_semantics<parallel>], iteration_bounds = array<i64: 2>, scalar_prefetch = 0 : i64, scratch_operands = 0 : i64, tpu.core_type = #tpu.core_type<tc>, window_params = [{transform_indices = @transform_0, window_bounds = array<i64: 1, 16, 256>}, {pipeline_mode = #tpu.pipeline_mode<synchronous>, transform_indices = @transform_1, window_bounds = array<i64: 4, 8, 16>}, {pipeline_mode = #tpu.pipeline_mode<synchronous>, transform_indices = @transform_2, window_bounds = array<i64: 8, 1>}, {transform_indices = @transform_3, window_bounds = array<i64: 1, 8, 128>}]} {
    %c0 = arith.constant 0 : index
    %c0_0 = arith.constant 0 : index
    %c0_1 = arith.constant 0 : index
    %0 = vector.load %arg1[%c0, %c0_0, %c0_1] : memref<1x16x256xf32, #tpu.memory_space<vmem>>, vector<1x16x256xf32>
    %1 = vector.shape_cast %0 : vector<1x16x256xf32> to vector<16x256xf32>
    %cst = arith.constant 0.000000e+00 : f32
    %2 = vector.broadcast %cst : f32 to vector<8x128xf32>
    %c0_2 = arith.constant 0 : index
    %c0_3 = arith.constant 0 : index
    %c0_4 = arith.constant 0 : index
    %3 = vector.load %arg2[%c0_2, %c0_3, %c0_4] : memref<4x8x16xf32, #tpu.memory_space<vmem>>, vector<1x8x16xf32>
    %4 = vector.shape_cast %3 : vector<1x8x16xf32> to vector<8x16xf32>
    %5 = vector.extract_strided_slice %1 {offsets = [0, 0], sizes = [16, 128], strides = [1, 1]} : vector<16x256xf32> to vector<16x128xf32>
    %cst_5 = arith.constant dense<0.000000e+00> : vector<8x128xf32>
    %6 = tpu.matmul %4, %5, %cst_5 {dimension_numbers = #tpu.dot_dimension_numbers<[1], [0], [0], [1], [0, 0, 1, 1], [], []>} : vector<8x16xf32>, vector<16x128xf32>, vector<8x128xf32> -> vector<8x128xf32>
    %7 = arith.addf %2, %6 : vector<8x128xf32>
    %c1 = arith.constant 1 : index
    %c0_6 = arith.constant 0 : index
    %c0_7 = arith.constant 0 : index
    %8 = vector.load %arg2[%c1, %c0_6, %c0_7] : memref<4x8x16xf32, #tpu.memory_space<vmem>>, vector<1x8x16xf32>
    %9 = vector.shape_cast %8 : vector<1x8x16xf32> to vector<8x16xf32>
    %10 = vector.extract_strided_slice %1 {offsets = [0, 1], sizes = [16, 128], strides = [1, 1]} : vector<16x256xf32> to vector<16x128xf32>
    %cst_8 = arith.constant dense<0.000000e+00> : vector<8x128xf32>
    %11 = tpu.matmul %9, %10, %cst_8 {dimension_numbers = #tpu.dot_dimension_numbers<[1], [0], [0], [1], [0, 0, 1, 1], [], []>} : vector<8x16xf32>, vector<16x128xf32>, vector<8x128xf32> -> vector<8x128xf32>
    %12 = arith.addf %7, %11 : vector<8x128xf32>
    %c2 = arith.constant 2 : index
    %c0_9 = arith.constant 0 : index
    %c0_10 = arith.constant 0 : index
    %13 = vector.load %arg2[%c2, %c0_9, %c0_10] : memref<4x8x16xf32, #tpu.memory_space<vmem>>, vector<1x8x16xf32>
    %14 = vector.shape_cast %13 : vector<1x8x16xf32> to vector<8x16xf32>
    %15 = vector.extract_strided_slice %1 {offsets = [0, 9], sizes = [16, 128], strides = [1, 1]} : vector<16x256xf32> to vector<16x128xf32>
    %cst_11 = arith.constant dense<0.000000e+00> : vector<8x128xf32>
    %16 = tpu.matmul %14, %15, %cst_11 {dimension_numbers = #tpu.dot_dimension_numbers<[1], [0], [0], [1], [0, 0, 1, 1], [], []>} : vector<8x16xf32>, vector<16x128xf32>, vector<8x128xf32> -> vector<8x128xf32>
    %17 = arith.addf %12, %16 : vector<8x128xf32>
    %c3 = arith.constant 3 : index
    %c0_12 = arith.constant 0 : index
    %c0_13 = arith.constant 0 : index
    %18 = vector.load %arg2[%c3, %c0_12, %c0_13] : memref<4x8x16xf32, #tpu.memory_space<vmem>>, vector<1x8x16xf32>
    %19 = vector.shape_cast %18 : vector<1x8x16xf32> to vector<8x16xf32>
    %20 = vector.extract_strided_slice %1 {offsets = [0, 10], sizes = [16, 128], strides = [1, 1]} : vector<16x256xf32> to vector<16x128xf32>
    %cst_14 = arith.constant dense<0.000000e+00> : vector<8x128xf32>
    %21 = tpu.matmul %19, %20, %cst_14 {dimension_numbers = #tpu.dot_dimension_numbers<[1], [0], [0], [1], [0, 0, 1, 1], [], []>} : vector<8x16xf32>, vector<16x128xf32>, vector<8x128xf32> -> vector<8x128xf32>
    %22 = arith.addf %17, %21 : vector<8x128xf32>
    %c0_15 = arith.constant 0 : index
    %c0_16 = arith.constant 0 : index
    %23 = vector.load %arg3[%c0_15, %c0_16] : memref<8x1xf32, #tpu.memory_space<vmem>>, vector<8x1xf32>
    %24 = vector.broadcast %23 : vector<8x1xf32> to vector<8x128xf32>
    %25 = arith.addf %22, %24 : vector<8x128xf32>
    %c0_17 = arith.constant 0 : index
    %c0_18 = arith.constant 0 : index
    %c0_19 = arith.constant 0 : index
    %26 = vector.load %arg4[%c0_17, %c0_18, %c0_19] : memref<1x8x128xf32, #tpu.memory_space<vmem>>, vector<1x8x128xf32>
    %27 = vector.shape_cast %26 : vector<1x8x128xf32> to vector<8x128xf32>
    %28 = vector.shape_cast %25 : vector<8x128xf32> to vector<1x8x128xf32>
    tpu.vector_store %arg4[%c0_17, %c0_18, %c0_19], %28 {strides = array<i32>} : memref<1x8x128xf32, #tpu.memory_space<vmem>>, vector<1x8x128xf32>,
    return
  }
  func.func @transform_0(%arg0: i32) -> (i32, i32, i32) {
    %c0_i32 = arith.constant 0 : i32
    %c0_i32_0 = arith.constant 0 : i32
    %c0_i32_1 = arith.constant 0 : i32
    return %arg0, %c0_i32, %c0_i32_0 : i32, i32, i32
  }
  func.func @transform_1(%arg0: i32) -> (i32, i32, i32) {
    %c0_i32 = arith.constant 0 : i32
    %c0_i32_0 = arith.constant 0 : i32
    %c0_i32_1 = arith.constant 0 : i32
    %c0_i32_2 = arith.constant 0 : i32
    return %c0_i32, %c0_i32_0, %c0_i32_1 : i32, i32, i32
  }
  func.func @transform_2(%arg0: i32) -> (i32, i32) {
    %c0_i32 = arith.constant 0 : i32
    %c0_i32_0 = arith.constant 0 : i32
    %c0_i32_1 = arith.constant 0 : i32
    return %c0_i32, %c0_i32_0 : i32, i32
  }
  func.func @transform_3(%arg0: i32) -> (i32, i32, i32) {
    %c0_i32 = arith.constant 0 : i32
    %c0_i32_0 = arith.constant 0 : i32
    %c0_i32_1 = arith.constant 0 : i32
    return %arg0, %c0_i32, %c0_i32_0 : i32, i32, i32
  }
}

</mosaic_0001>

<llo_original>
// kernel: downsample_forward.1
$region0: #{downsample_forward.1}
  #allocation0 [shape = 'u32[]', space=smem, size = 0x4, offset = 0x4, fixed_abs, tag = 'smem constant byte address 0x4 - core index']
  #allocation1 [shape = 'u32[144,128]{1,0:T(1,128)}', space=vmem, size = 0x12000, scoped, tag = 'internal scratch']
  %s0 = inlined_call_operand.vmem [shape: f32[2,16,256], index: 0, kind: input, shape index: {}]
  %s1 = inlined_call_operand.vmem [shape: f32[4,8,16], index: 1, kind: input, shape index: {}]
  %s2 = inlined_call_operand.vmem [shape: f32[8,1], index: 2, kind: input, shape index: {}]
  %s3 = inlined_call_operand.vmem [shape: f32[2,8,128], index: 3, kind: output, shape index: {}]
  %s4 = sld [smem:[#allocation0]]
  $region45: #{downsample_forward.1} parent=0
    _
  %s6 = ssub.s32 1, %s4
  %s7 = scalar_select 0, %s6, %s4
  loop: start=0, step=1, limit=4
  $region2: #{downsample_forward.1} parent=0 // loop_pre_header
    _
  $region3: #{downsample_forward.1} parent=0 // loop_header
    %s9 = sphi 0, %s13
    %p10 = scmp.ge.s32.totalorder %s9, 4
    %s19 = sphi 0, %s21
    %s22 = sphi 0, %s19
    %s23 = sphi 0, %s22
    %s39 = sphi 0, %s23
    %s43 = sphi 0, %s43
    %s45 = sphi 0, %s43
    %s46 = sphi 0, %s45
    %s60 = sphi 0, %s46
    %s64 = sphi 0, %s64
    %s66 = sphi 0, %s64
    %s67 = sphi 0, %s66
    %s81 = sphi 0, %s67
    %s87 = sphi 0, %s89
    %s90 = sphi 0, %s87
    %s91 = sphi 0, %s90
    %s107 = sphi 0, %s91
  $region4: #{downsample_forward.1} parent=0 // loop_header_branch
    %12 = sbr.rel (%p10) target = $region8
  $region5: #{downsample_forward.1} parent=0 // loop_body
    %s14 = ssub.s32 %s9, 1
    %s15 = ssub.s32 %s9, 2
    %s16 = sadd.s32 %s9, 1
    %s17 = ssub.s32 %s9, %s16
    %p18 = scmp.eq.s32.totalorder %s17, 0
    %s20 = sadd.s32 %s19, 1
    %s21 = scalar_select %p18, %s19, %s20
    %p24 = pneg %p18
    %p25 = scmp.eq.s32.totalorder %s9, 1
    %p26 = por %p24, %p25
    %p27 = scmp.ne.s32.totalorder %s19, %s22
    %p28 = scmp.eq.s32.totalorder %s9, 0
    %p29 = por %p27, %p28
    %p30 = scmp.ne.s32.totalorder %s19, %s22
    %p31 = scmp.eq.s32.totalorder %s14, 1
    %p32 = por %p30, %p31
    %p33 = scmp.ne.s32.totalorder %s22, %s23
    %p34 = scmp.eq.s32.totalorder %s14, 0
    %p35 = por %p33, %p34
    %p36 = scmp.ne.s32.totalorder %s22, %s23
    %p37 = scmp.eq.s32.totalorder %s15, 1
    %p38 = por %p36, %p37
    %p40 = scmp.ne.s32.totalorder %s23, %s39
    %p41 = scmp.eq.s32.totalorder %s15, 0
    %p42 = por %p40, %p41
    %s44 = sadd.s32 %s43, 1
    %p47 = scmp.eq.s32.totalorder %s9, 1
    %p48 = scmp.ne.s32.totalorder %s43, %s45
    %p49 = scmp.eq.s32.totalorder %s9, 0
    %p50 = por %p48, %p49
    %p51 = scmp.ne.s32.totalorder %s43, %s45
    %p52 = scmp.eq.s32.totalorder %s14, 1
    %p53 = por %p51, %p52
    %p54 = scmp.ne.s32.totalorder %s45, %s46
    %p55 = scmp.eq.s32.totalorder %s14, 0
    %p56 = por %p54, %p55
    %p57 = scmp.ne.s32.totalorder %s45, %s46
    %p58 = scmp.eq.s32.totalorder %s15, 1
    %p59 = por %p57, %p58
    %p61 = scmp.ne.s32.totalorder %s46, %s60
    %p62 = scmp.eq.s32.totalorder %s15, 0
    %p63 = por %p61, %p62
    %s65 = sadd.s32 %s64, 1
    %p68 = scmp.eq.s32.totalorder %s9, 1
    %p69 = scmp.ne.s32.totalorder %s64, %s66
    %p70 = scmp.eq.s32.totalorder %s9, 0
    %p71 = por %p69, %p70
    %p72 = scmp.ne.s32.totalorder %s64, %s66
    %p73 = scmp.eq.s32.totalorder %s14, 1
    %p74 = por %p72, %p73
    %p75 = scmp.ne.s32.totalorder %s66, %s67
    %p76 = scmp.eq.s32.totalorder %s14, 0
    %p77 = por %p75, %p76
    %p78 = scmp.ne.s32.totalorder %s66, %s67
    %p79 = scmp.eq.s32.totalorder %s15, 1
    %p80 = por %p78, %p79
    %p82 = scmp.ne.s32.totalorder %s67, %s81
    %p83 = scmp.eq.s32.totalorder %s15, 0
    %p84 = por %p82, %p83
    %s85 = ssub.s32 %s9, %s16
    %p86 = scmp.eq.s32.totalorder %s85, 0
    %s88 = sadd.s32 %s87, 1
    %s89 = scalar_select %p86, %s87, %s88
    %p92 = pneg %p86
    %p93 = scmp.eq.s32.totalorder %s9, 1
    %p94 = por %p92, %p93
    %p95 = scmp.ne.s32.totalorder %s87, %s90
    %p96 = scmp.eq.s32.totalorder %s9, 0
    %p97 = por %p95, %p96
    %p98 = scmp.ne.s32.totalorder %s87, %s90
    %p99 = scmp.eq.s32.totalorder %s14, 1
    %p100 = por %p98, %p99
    %p101 = scmp.ne.s32.totalorder %s90, %s91
    %p102 = scmp.eq.s32.totalorder %s14, 0
    %p103 = por %p101, %p102
    %p104 = scmp.ne.s32.totalorder %s90, %s91
    %p105 = scmp.eq.s32.totalorder %s15, 1
    %p106 = por %p104, %p105
    %p108 = scmp.ne.s32.totalorder %s91, %s107
    %p109 = scmp.eq.s32.totalorder %s15, 0
    %p110 = por %p108, %p109
    %p111 = scmp.le.s32.totalorder 1, %s9
    %p112 = scmp.lt.s32.totalorder %s9, 3
    %p113 = pnand %p111, %p112
    %p114 = pneg %p113
    // Predicated region
    $region9: #{downsample_forward.1} parent=5 // pred_check
      _
    $region10: #{downsample_forward.1} parent=5 // pred_check_branch
      %116 = sbr.rel (%p113) target = $region12
    $region11: #{downsample_forward.1} parent=5 // pred_region
      %s117 = ssub.s32 %s9, 1
      // Predicated region
      $region13: #{downsample_forward.1} parent=11 // pred_check
        %p118 = pneg %p56
      $region14: #{downsample_forward.1} parent=11 // pred_check_branch
        %120 = sbr.rel (%p118) target = $region16
      $region15: #{downsample_forward.1} parent=11 // pred_region
        _
      $region16: #{downsample_forward.1} parent=11 // pred_fallthru
        _
      // Predicated region
      $region17: #{downsample_forward.1} parent=11 // pred_check
        %p121 = pneg %p77
      $region18: #{downsample_forward.1} parent=11 // pred_check_branch
        %123 = sbr.rel (%p121) target = $region20
      $region19: #{downsample_forward.1} parent=11 // pred_region
        _
      $region20: #{downsample_forward.1} parent=11 // pred_fallthru
        _
    $region12: #{downsample_forward.1} parent=5 // pred_fallthru
      _
    %p124 = scmp.lt.s32.totalorder %s9, 2
    // Predicated region
    $region21: #{downsample_forward.1} parent=5 // pred_check
      %p125 = pneg %p124
    $region22: #{downsample_forward.1} parent=5 // pred_check_branch
      %127 = sbr.rel (%p125) target = $region24
    $region23: #{downsample_forward.1} parent=5 // pred_region
      // Predicated region
      $region25: #{downsample_forward.1} parent=23 // pred_check
        %p128 = pneg %p29
      $region26: #{downsample_forward.1} parent=23 // pred_check_branch
        %130 = sbr.rel (%p128) target = $region28
      $region27: #{downsample_forward.1} parent=23 // pred_region
        %p131 = scmp.lt.s32.totalorder %s9, 1
        %s132 = scalar_select %p131, %s9, 1
        %s133 = smul.addr %s132, 4
        %s134 = smul.addr %s133, 8
        %s135 = scalar_lea.vmem %s0, %s134
      $region28: #{downsample_forward.1} parent=23 // pred_fallthru
        _
    $region24: #{downsample_forward.1} parent=5 // pred_fallthru
      _
    %p136 = scmp.le.s32.totalorder 1, %s9
    %p137 = scmp.lt.s32.totalorder %s9, 3
    %p138 = pnand %p136, %p137
    %p139 = pneg %p138
    // Predicated region
    $region29: #{downsample_forward.1} parent=5 // pred_check
      _
    $region30: #{downsample_forward.1} parent=5 // pred_check_branch
      %141 = sbr.rel (%p138) target = $region32
    $region31: #{downsample_forward.1} parent=5 // pred_region
      %s142 = ssub.s32 %s9, 1
      %p143 = scmp.lt.s32.totalorder %s14, 1
      %s144 = scalar_select %p143, %s14, 1
      %s145 = smul.addr %s144, 4
      %s146 = smul.addr %s145, 8
      %s147 = scalar_lea.vmem %s0, %s146
      %p148 = pneg %p35
      %p149 = pneg %p32
      %p150 = pneg %p56
      %p151 = pneg %p53
      %p152 = pneg %p77
      %p153 = pneg %p74
      %p154 = pneg %p103
      %p155 = pneg %p100
      %p156 = scmp.lt.s32.totalorder %s14, 1
      %s157 = scalar_select %p156, %s14, 1
      %s158 = smul.addr %s157, 8
      %s159 = scalar_lea.vmem %s3, %s158
      %p160 = scmp.lt.s32.totalorder %s14, 1
      %s161 = scalar_select %p160, %s14, 1
      %s162 = smul.addr %s161, 4
      %s163 = smul.addr %s162, 8
      %s164 = scalar_lea.vmem %s0, %s163
      %p165 = scmp.lt.s32.totalorder %s14, 1
      %s166 = scalar_select %p165, %s14, 1
      %s167 = smul.addr %s166, 8
      %s168 = scalar_lea.vmem %s3, %s167
      %v169 = vld [vmem:[%s164] sm:$0xff]
      %v170 = vld [vmem:[%s164 + $0x8] sm:$0xff]
      %v171 = vld [vmem:[%s164 + $0x10] sm:$0xff]
      %v172 = vld [vmem:[%s164 + $0x18] sm:$0xff]
      %v173 = vld [vmem:[%s1] sm:$0xff]
      %s174 = scalar_lea.vmem %s1, 8
      %v175 = vld [vmem:[%s174] sm:$0xff]
      %180 = vrot.lane.b32.xlu0 %v169, 127
      %v181 = vpop.permute.xlu0 %180
      %182 = vrot.lane.b32.xlu0 %v170, 127
      %v183 = vpop.permute.xlu0 %182
      %184 = vrot.lane.b32.xlu0 %v171, 127
      %v185 = vpop.permute.xlu0 %184
      %186 = vrot.lane.b32.xlu0 %v172, 127
      %v187 = vpop.permute.xlu0 %186
      %vm188 = vcmask 1039360
      %v189 = vsel %vm188, %v181, %v183
      %v190 = vsel %vm188, %v185, %v187
      %vm193 = vcmask 130048
      %v195 = vsel %vm193, %v175, 0
      %197 = vmatprep.subr.mxu0 0.0
      %198 = vmatpush1.msra.mxu0 0.0
      %199 = vmatprep.subr.mxu0 0.0
      %200 = vmatpush1.msra.mxu0 0.0
      %201 = vmatprep.subr.mxu0 0.0
      %202 = vmatpush1.msra.mxu0 0.0
      %203 = vmatprep.subr.mxu0 0.0
      %204 = vmatpush1.msra.mxu0 0.0
      %205 = vmatprep.subr.mxu0 0.0
      %206 = vmatpush1.msra.mxu0 0.0
      %207 = vmatprep.subr.mxu0 0.0
      %208 = vmatpush1.msra.mxu0 0.0
      %209 = vmatprep.subr.mxu0 0.0
      %210 = vmatpush1.msra.mxu0 0.0
      %211 = vmatprep.subr.mxu0 0.0
      %212 = vmatpush1.msra.mxu0 0.0
      %213 = vmatprep.subr.mxu0 0.0
      %214 = vmatpush1.msra.mxu0 0.0
      %215 = vmatprep.subr.mxu0 0.0
      %216 = vmatpush1.msra.mxu0 0.0
      %217 = vmatprep.subr.mxu0 0.0
      %218 = vmatpush1.msra.mxu0 0.0
      %219 = vmatprep.subr.mxu0 0.0
      %220 = vmatpush1.msra.mxu0 0.0
      %221 = vmatprep.subr.mxu0 0.0
      %222 = vmatpush1.msra.mxu0 0.0
      %223 = vmatprep.subr.mxu0 0.0
      %224 = vmatpush1.msra.mxu0 0.0
      %225 = vmatprep.subr.mxu0 0.0
      %226 = vmatpush1.msra.mxu0 %v190
      %227 = vmatprep.subr.mxu0 0.0
      %228 = vmatpush1.msra.mxu0 %v189
      %229 = vmatprep.subr.mxu0 0.0
      %230 = vmatpush2.msra.mxu0 0.0
      %231 = vmatprep.subr.mxu0 0.0
      %232 = vmatpush2.msra.mxu0 0.0
      %233 = vmatprep.subr.mxu0 0.0
      %234 = vmatpush2.msra.mxu0 0.0
      %235 = vmatprep.subr.mxu0 0.0
      %236 = vmatpush2.msra.mxu0 0.0
      %237 = vmatprep.subr.mxu0 0.0
      %238 = vmatpush2.msra.mxu0 0.0
      %239 = vmatprep.subr.mxu0 0.0
      %240 = vmatpush2.msra.mxu0 0.0
      %241 = vmatprep.subr.mxu0 0.0
      %242 = vmatpush2.msra.mxu0 0.0
      %243 = vmatprep.subr.mxu0 0.0
      %244 = vmatpush2.msra.mxu0 0.0
      %245 = vmatprep.subr.mxu0 0.0
      %246 = vmatpush2.msra.mxu0 0.0
      %247 = vmatprep.subr.mxu0 0.0
      %248 = vmatpush2.msra.mxu0 0.0
      %249 = vmatprep.subr.mxu0 0.0
      %250 = vmatpush2.msra.mxu0 0.0
      %251 = vmatprep.subr.mxu0 0.0
      %252 = vmatpush2.msra.mxu0 0.0
      %253 = vmatprep.subr.mxu0 0.0
      %254 = vmatpush2.msra.mxu0 0.0
      %255 = vmatprep.subr.mxu0 0.0
      %256 = vmatpush2.msra.mxu0 0.0
      %257 = vmatprep.subr.mxu0 0.0
      %258 = vmatpush2.msra.mxu0 0.0
      %259 = vmatprep.subr.mxu0 0.0
      %260 = vmatpush2.msra.mxu0 0.0
      %261 = vmatprep.mubr.f32.mxu0 0.0
      %262 = vmatmul.mubr.f32.gmra.mxu0 %v195
      %v263 = vpop.f32.mrf.mxu0
      %v264 = vadd.f32 0.0, %v263
      %v265 = vpop.f32.mrf.mxu0
      %266 = vdwg.mxu0
      %v268 = vsel %vm193, %v173, 0
      %270 = vmatprep.subr.mxu0 0.0
      %271 = vmatpush1.msra.mxu0 0.0
      %272 = vmatprep.subr.mxu0 0.0
      %273 = vmatpush1.msra.mxu0 0.0
      %274 = vmatprep.subr.mxu0 0.0
      %275 = vmatpush1.msra.mxu0 0.0
      %276 = vmatprep.subr.mxu0 0.0
      %277 = vmatpush1.msra.mxu0 0.0
      %278 = vmatprep.subr.mxu0 0.0
      %279 = vmatpush1.msra.mxu0 0.0
      %280 = vmatprep.subr.mxu0 0.0
      %281 = vmatpush1.msra.mxu0 0.0
      %282 = vmatprep.subr.mxu0 0.0
      %283 = vmatpush1.msra.mxu0 0.0
      %284 = vmatprep.subr.mxu0 0.0
      %285 = vmatpush1.msra.mxu0 0.0
      %286 = vmatprep.subr.mxu0 0.0
      %287 = vmatpush1.msra.mxu0 0.0
      %288 = vmatprep.subr.mxu0 0.0
      %289 = vmatpush1.msra.mxu0 0.0
      %290 = vmatprep.subr.mxu0 0.0
      %291 = vmatpush1.msra.mxu0 0.0
      %292 = vmatprep.subr.mxu0 0.0
      %293 = vmatpush1.msra.mxu0 0.0
      %294 = vmatprep.subr.mxu0 0.0
      %295 = vmatpush1.msra.mxu0 0.0
      %296 = vmatprep.subr.mxu0 0.0
      %297 = vmatpush1.msra.mxu0 0.0
      %298 = vmatprep.subr.mxu0 0.0
      %299 = vmatpush1.msra.mxu0 %v171
      %300 = vmatprep.subr.mxu0 0.0
      %301 = vmatpush1.msra.mxu0 %v169
      %302 = vmatprep.subr.mxu0 0.0
      %303 = vmatpush2.msra.mxu0 0.0
      %304 = vmatprep.subr.mxu0 0.0
      %305 = vmatpush2.msra.mxu0 0.0
      %306 = vmatprep.subr.mxu0 0.0
      %307 = vmatpush2.msra.mxu0 0.0
      %308 = vmatprep.subr.mxu0 0.0
      %309 = vmatpush2.msra.mxu0 0.0
      %310 = vmatprep.subr.mxu0 0.0
      %311 = vmatpush2.msra.mxu0 0.0
      %312 = vmatprep.subr.mxu0 0.0
      %313 = vmatpush2.msra.mxu0 0.0
      %314 = vmatprep.subr.mxu0 0.0
      %315 = vmatpush2.msra.mxu0 0.0
      %316 = vmatprep.subr.mxu0 0.0
      %317 = vmatpush2.msra.mxu0 0.0
      %318 = vmatprep.subr.mxu0 0.0
      %319 = vmatpush2.msra.mxu0 0.0
      %320 = vmatprep.subr.mxu0 0.0
      %321 = vmatpush2.msra.mxu0 0.0
      %322 = vmatprep.subr.mxu0 0.0
      %323 = vmatpush2.msra.mxu0 0.0
      %324 = vmatprep.subr.mxu0 0.0
      %325 = vmatpush2.msra.mxu0 0.0
      %326 = vmatprep.subr.mxu0 0.0
      %327 = vmatpush2.msra.mxu0 0.0
      %328 = vmatprep.subr.mxu0 0.0
      %329 = vmatpush2.msra.mxu0 0.0
      %330 = vmatprep.subr.mxu0 0.0
      %331 = vmatpush2.msra.mxu0 0.0
      %332 = vmatprep.subr.mxu0 0.0
      %333 = vmatpush2.msra.mxu0 0.0
      %334 = vmatprep.mubr.f32.mxu0 0.0
      %335 = vmatmul.mubr.f32.gmra.mxu0 %v268
      %v336 = vpop.f32.mrf.mxu0
      %v337 = vadd.f32 %v264, %v336
      %v338 = vpop.f32.mrf.mxu0
      %339 = vdwg.mxu0
      %s340 = scalar_lea.vmem %s1, 16
      %v341 = vld [vmem:[%s340] sm:$0xff]
      %342 = vrot.lane.b32.xlu0 %v169, 119
      %v343 = vpop.permute.xlu0 %342
      %344 = vrot.lane.b32.xlu0 %v170, 119
      %v345 = vpop.permute.xlu0 %344
      %346 = vrot.lane.b32.xlu0 %v171, 119
      %v347 = vpop.permute.xlu0 %346
      %348 = vrot.lane.b32.xlu0 %v172, 119
      %v349 = vpop.permute.xlu0 %348
      %vm350 = vcmask 973824
      %v351 = vsel %vm350, %v343, %v345
      %v352 = vsel %vm350, %v347, %v349
      %v356 = vsel %vm193, %v341, 0
      %358 = vmatprep.subr.mxu0 0.0
      %359 = vmatpush1.msra.mxu0 0.0
      %360 = vmatprep.subr.mxu0 0.0
      %361 = vmatpush1.msra.mxu0 0.0
      %362 = vmatprep.subr.mxu0 0.0
      %363 = vmatpush1.msra.mxu0 0.0
      %364 = vmatprep.subr.mxu0 0.0
      %365 = vmatpush1.msra.mxu0 0.0
      %366 = vmatprep.subr.mxu0 0.0
      %367 = vmatpush1.msra.mxu0 0.0
      %368 = vmatprep.subr.mxu0 0.0
      %369 = vmatpush1.msra.mxu0 0.0
      %370 = vmatprep.subr.mxu0 0.0
      %371 = vmatpush1.msra.mxu0 0.0
      %372 = vmatprep.subr.mxu0 0.0
      %373 = vmatpush1.msra.mxu0 0.0
      %374 = vmatprep.subr.mxu0 0.0
      %375 = vmatpush1.msra.mxu0 0.0
      %376 = vmatprep.subr.mxu0 0.0
      %377 = vmatpush1.msra.mxu0 0.0
      %378 = vmatprep.subr.mxu0 0.0
      %379 = vmatpush1.msra.mxu0 0.0
      %380 = vmatprep.subr.mxu0 0.0
      %381 = vmatpush1.msra.mxu0 0.0
      %382 = vmatprep.subr.mxu0 0.0
      %383 = vmatpush1.msra.mxu0 0.0
      %384 = vmatprep.subr.mxu0 0.0
      %385 = vmatpush1.msra.mxu0 0.0
      %386 = vmatprep.subr.mxu0 0.0
      %387 = vmatpush1.msra.mxu0 %v352
      %388 = vmatprep.subr.mxu0 0.0
      %389 = vmatpush1.msra.mxu0 %v351
      %390 = vmatprep.subr.mxu0 0.0
      %391 = vmatpush2.msra.mxu0 0.0
      %392 = vmatprep.subr.mxu0 0.0
      %393 = vmatpush2.msra.mxu0 0.0
      %394 = vmatprep.subr.mxu0 0.0
      %395 = vmatpush2.msra.mxu0 0.0
      %396 = vmatprep.subr.mxu0 0.0
      %397 = vmatpush2.msra.mxu0 0.0
      %398 = vmatprep.subr.mxu0 0.0
      %399 = vmatpush2.msra.mxu0 0.0
      %400 = vmatprep.subr.mxu0 0.0
      %401 = vmatpush2.msra.mxu0 0.0
      %402 = vmatprep.subr.mxu0 0.0
      %403 = vmatpush2.msra.mxu0 0.0
      %404 = vmatprep.subr.mxu0 0.0
      %405 = vmatpush2.msra.mxu0 0.0
      %406 = vmatprep.subr.mxu0 0.0
      %407 = vmatpush2.msra.mxu0 0.0
      %408 = vmatprep.subr.mxu0 0.0
      %409 = vmatpush2.msra.mxu0 0.0
      %410 = vmatprep.subr.mxu0 0.0
      %411 = vmatpush2.msra.mxu0 0.0
      %412 = vmatprep.subr.mxu0 0.0
      %413 = vmatpush2.msra.mxu0 0.0
      %414 = vmatprep.subr.mxu0 0.0
      %415 = vmatpush2.msra.mxu0 0.0
      %416 = vmatprep.subr.mxu0 0.0
      %417 = vmatpush2.msra.mxu0 0.0
      %418 = vmatprep.subr.mxu0 0.0
      %419 = vmatpush2.msra.mxu0 0.0
      %420 = vmatprep.subr.mxu0 0.0
      %421 = vmatpush2.msra.mxu0 0.0
      %422 = vmatprep.mubr.f32.mxu0 0.0
      %423 = vmatmul.mubr.f32.gmra.mxu0 %v356
      %v424 = vpop.f32.mrf.mxu0
      %v425 = vadd.f32 0.0, %v424
      %v426 = vpop.f32.mrf.mxu0
      %427 = vdwg.mxu0
      %v428 = vadd.f32 %v337, %v425
      %s429 = scalar_lea.vmem %s1, 24
      %v430 = vld [vmem:[%s429] sm:$0xff]
      %431 = vrot.lane.b32.xlu0 %v169, 118
      %v432 = vpop.permute.xlu0 %431
      %433 = vrot.lane.b32.xlu0 %v170, 118
      %v434 = vpop.permute.xlu0 %433
      %435 = vrot.lane.b32.xlu0 %v171, 118
      %v436 = vpop.permute.xlu0 %435
      %437 = vrot.lane.b32.xlu0 %v172, 118
      %v438 = vpop.permute.xlu0 %437
      %vm439 = vcmask 965632
      %v440 = vsel %vm439, %v432, %v434
      %v441 = vsel %vm439, %v436, %v438
      %v445 = vsel %vm193, %v430, 0
      %447 = vmatprep.subr.mxu0 0.0
      %448 = vmatpush1.msra.mxu0 0.0
      %449 = vmatprep.subr.mxu0 0.0
      %450 = vmatpush1.msra.mxu0 0.0
      %451 = vmatprep.subr.mxu0 0.0
      %452 = vmatpush1.msra.mxu0 0.0
      %453 = vmatprep.subr.mxu0 0.0
      %454 = vmatpush1.msra.mxu0 0.0
      %455 = vmatprep.subr.mxu0 0.0
      %456 = vmatpush1.msra.mxu0 0.0
      %457 = vmatprep.subr.mxu0 0.0
      %458 = vmatpush1.msra.mxu0 0.0
      %459 = vmatprep.subr.mxu0 0.0
      %460 = vmatpush1.msra.mxu0 0.0
      %461 = vmatprep.subr.mxu0 0.0
      %462 = vmatpush1.msra.mxu0 0.0
      %463 = vmatprep.subr.mxu0 0.0
      %464 = vmatpush1.msra.mxu0 0.0
      %465 = vmatprep.subr.mxu0 0.0
      %466 = vmatpush1.msra.mxu0 0.0
      %467 = vmatprep.subr.mxu0 0.0
      %468 = vmatpush1.msra.mxu0 0.0
      %469 = vmatprep.subr.mxu0 0.0
      %470 = vmatpush1.msra.mxu0 0.0
      %471 = vmatprep.subr.mxu0 0.0
      %472 = vmatpush1.msra.mxu0 0.0
      %473 = vmatprep.subr.mxu0 0.0
      %474 = vmatpush1.msra.mxu0 0.0
      %475 = vmatprep.subr.mxu0 0.0
      %476 = vmatpush1.msra.mxu0 %v441
      %477 = vmatprep.subr.mxu0 0.0
      %478 = vmatpush1.msra.mxu0 %v440
      %479 = vmatprep.subr.mxu0 0.0
      %480 = vmatpush2.msra.mxu0 0.0
      %481 = vmatprep.subr.mxu0 0.0
      %482 = vmatpush2.msra.mxu0 0.0
      %483 = vmatprep.subr.mxu0 0.0
      %484 = vmatpush2.msra.mxu0 0.0
      %485 = vmatprep.subr.mxu0 0.0
      %486 = vmatpush2.msra.mxu0 0.0
      %487 = vmatprep.subr.mxu0 0.0
      %488 = vmatpush2.msra.mxu0 0.0
      %489 = vmatprep.subr.mxu0 0.0
      %490 = vmatpush2.msra.mxu0 0.0
      %491 = vmatprep.subr.mxu0 0.0
      %492 = vmatpush2.msra.mxu0 0.0
      %493 = vmatprep.subr.mxu0 0.0
      %494 = vmatpush2.msra.mxu0 0.0
      %495 = vmatprep.subr.mxu0 0.0
      %496 = vmatpush2.msra.mxu0 0.0
      %497 = vmatprep.subr.mxu0 0.0
      %498 = vmatpush2.msra.mxu0 0.0
      %499 = vmatprep.subr.mxu0 0.0
      %500 = vmatpush2.msra.mxu0 0.0
      %501 = vmatprep.subr.mxu0 0.0
      %502 = vmatpush2.msra.mxu0 0.0
      %503 = vmatprep.subr.mxu0 0.0
      %504 = vmatpush2.msra.mxu0 0.0
      %505 = vmatprep.subr.mxu0 0.0
      %506 = vmatpush2.msra.mxu0 0.0
      %507 = vmatprep.subr.mxu0 0.0
      %508 = vmatpush2.msra.mxu0 0.0
      %509 = vmatprep.subr.mxu0 0.0
      %510 = vmatpush2.msra.mxu0 0.0
      %511 = vmatprep.mubr.f32.mxu0 0.0
      %512 = vmatmul.mubr.f32.gmra.mxu0 %v445
      %v513 = vpop.f32.mrf.mxu0
      %v514 = vadd.f32 0.0, %v513
      %v515 = vpop.f32.mrf.mxu0
      %516 = vdwg.mxu0
      %v517 = vadd.f32 %v428, %v514
      %v518 = vld [vmem:[%s2] sm:$0xff]
      %520 = vset.pattern.permute.xlu0 0
      %521 = vperm.xlu0 %520, %v518
      %v522 = vpop.permute.xlu0 %521
      %v524 = vadd.f32 %v517, %v522
      %525 = vst [vmem:[%s168] sm:$0xff] %v524
      %p526 = scmp.lt.s32.totalorder %s14, 1
      %s527 = scalar_select %p526, %s14, 1
      %s528 = smul.addr %s527, 8
      %s529 = scalar_lea.vmem %s3, %s528
      // Predicated region
      $region33: #{downsample_forward.1} parent=31 // pred_check
        %p530 = pneg %p100
      $region34: #{downsample_forward.1} parent=31 // pred_check_branch
        %532 = sbr.rel (%p530) target = $region36
      $region35: #{downsample_forward.1} parent=31 // pred_region
        _
      $region36: #{downsample_forward.1} parent=31 // pred_fallthru
        _
    $region32: #{downsample_forward.1} parent=5 // pred_fallthru
      _
    %p533 = scmp.le.s32.totalorder 2, %s9
    // Predicated region
    $region37: #{downsample_forward.1} parent=5 // pred_check
      %p534 = pneg %p533
    $region38: #{downsample_forward.1} parent=5 // pred_check_branch
      %536 = sbr.rel (%p534) target = $region40
    $region39: #{downsample_forward.1} parent=5 // pred_region
      %s537 = ssub.s32 %s9, 2
      // Predicated region
      $region41: #{downsample_forward.1} parent=39 // pred_check
        %p538 = pneg %p106
      $region42: #{downsample_forward.1} parent=39 // pred_check_branch
        %540 = sbr.rel (%p538) target = $region44
      $region43: #{downsample_forward.1} parent=39 // pred_region
        %p541 = scmp.lt.s32.totalorder %s15, 1
        %s542 = scalar_select %p541, %s15, 1
        %s543 = smul.addr %s542, 8
        %s544 = scalar_lea.vmem %s3, %s543
      $region44: #{downsample_forward.1} parent=39 // pred_fallthru
        _
    $region40: #{downsample_forward.1} parent=5 // pred_fallthru
      _
  $region6: #{downsample_forward.1} parent=0 // loop_footer
    %s13 = sadd.s32 1, %s9
  $region7: #{downsample_forward.1} parent=0 // loop_footer_branch
    %8 = sbr.rel target = $region3
  $region8: #{downsample_forward.1} parent=0 // loop_exit
    _

</llo_original>
